<compile_context>
chip_gen: v5e
topology: v5e:2x2
jax: 0.10.0
libtpu: 0.0.40
codegen_flags: <defaults>
</compile_context>

<pallas_src>
import functools

import jax
import jax.numpy as jnp
from jax.experimental import pallas as pl
from jax.experimental.pallas import tpu as pltpu

LANE = 128


def _mlp_kernel(x_ref, w0_ref, b0_ref, w1_ref, b1_ref, w2_ref, b2_ref, out_ref):
    # Whole (small) problem fits in VMEM; one batch tile per grid step.
    x = x_ref[...]                                           # bf16 (tb, in_dim)
    h = jnp.dot(x, w0_ref[...], preferred_element_type=jnp.float32) + b0_ref[...]
    h = jnp.maximum(h, 0.0).astype(w1_ref.dtype)             # bf16 for next MXU pass
    h = jnp.dot(h, w1_ref[...], preferred_element_type=jnp.float32) + b1_ref[...]
    h = jnp.maximum(h, 0.0).astype(w2_ref.dtype)
    logits = jnp.dot(h, w2_ref[...], preferred_element_type=jnp.float32) + b2_ref[...]
    out_ref[...] = logits.astype(out_ref.dtype)              # lane-dense (tb, 128) store


def prepare_params(params, compute_dtype=jnp.bfloat16):
    """One-time weight prep: transpose nn.Linear (out,in) -> (in,out), cast to
    bf16, and zero-pad the classes dim up to a multiple of 128 lanes.
    Biases stay f32 (added after the f32-accumulated dot), kept 2D in VMEM."""
    w0 = params["layer0.weight"].T.astype(compute_dtype)        # (in_dim, hidden)
    b0 = params["layer0.bias"][None, :].astype(jnp.float32)     # (1, hidden)
    w1 = params["layer1.weight"].T.astype(compute_dtype)        # (hidden, hidden)
    b1 = params["layer1.bias"][None, :].astype(jnp.float32)
    w2 = params["layer2.weight"].T.astype(compute_dtype)        # (hidden, classes)
    b2 = params["layer2.bias"][None, :].astype(jnp.float32)

    classes = w2.shape[1]
    classes_pad = max(LANE, -(-classes // LANE) * LANE)
    if classes_pad != classes:
        w2 = jnp.pad(w2, ((0, 0), (0, classes_pad - classes)))
        b2 = jnp.pad(b2, ((0, 0), (0, classes_pad - classes)))
    return {"w0": w0, "b0": b0, "w1": w1, "b1": b1, "w2": w2, "b2": b2}


@functools.partial(jax.jit, static_argnames=("classes",))
def cmaml_forward(x_nchw, prepared, classes):
    """Pallas forward pass for CmamlClassfier.

    x_nchw:   (B, C, H, W) float32 (flattened row-major like torch x.view(B,-1))
    prepared: output of prepare_params(params)
    classes:  number of real output classes (static)
    Returns logits (B, classes) float32.
    """
    B = x_nchw.shape[0]
    x = x_nchw.reshape(B, -1).astype(jnp.bfloat16)   # (B, C*H*W), bf16 for MXU
    in_dim = x.shape[1]

    w0, b0 = prepared["w0"], prepared["b0"]
    w1, b1 = prepared["w1"], prepared["b1"]
    w2, b2 = prepared["w2"], prepared["b2"]
    n_out = w2.shape[1]                              # lane-padded classes

    # Batch tiling: one full-batch block when small (no padding needed: full-array
    # blocks are exempt from the (8,128) rule); 128-row tiles for large batches so
    # the "parallel" grid axis shards across v7x's two TensorCores and x/out
    # pipelining hides the weight DMA.
    if B <= 128:
        tb = B
    else:
        tb = 128
        pad = (-B) % tb
        if pad:
            x = jnp.pad(x, ((0, pad), (0, 0)))
    nb = x.shape[0] // tb

    grid_spec = pltpu.PrefetchScalarGridSpec(
        num_scalar_prefetch=0,
        grid=(nb,),
        in_specs=[
            pl.BlockSpec((tb, in_dim), lambda i: (i, 0)),      # x: tiled over batch
            pl.BlockSpec(w0.shape, lambda i: (0, 0)),          # weights: resident
            pl.BlockSpec(b0.shape, lambda i: (0, 0)),
            pl.BlockSpec(w1.shape, lambda i: (0, 0)),
            pl.BlockSpec(b1.shape, lambda i: (0, 0)),
            pl.BlockSpec(w2.shape, lambda i: (0, 0)),
            pl.BlockSpec(b2.shape, lambda i: (0, 0)),
        ],
        out_specs=pl.BlockSpec((tb, n_out), lambda i: (i, 0)),
    )

    out = pl.pallas_call(
        _mlp_kernel,
        out_shape=jax.ShapeDtypeStruct((x.shape[0], n_out), jnp.float32),
        grid_spec=grid_spec,
        compiler_params=pltpu.CompilerParams(dimension_semantics=("parallel",)),
    )(x, w0, b0, w1, b1, w2, b2)

    return out[:B, :classes]


def init_params(key, image_size, image_channels, classes, hidden_units):
    """Deterministic init matching nn.Linear default (uniform +- 1/sqrt(fan_in))."""
    layer_sizes = (image_channels * image_size ** 2, hidden_units, hidden_units, classes)
    params = {}
    for i in range(1, len(layer_sizes)):
        fan_in, fan_out = layer_sizes[i - 1], layer_sizes[i]
        key, kw, kb = jax.random.split(key, 3)
        bound = 1.0 / (fan_in ** 0.5)
        params[f"layer{i - 1}.weight"] = jax.random.uniform(
            kw, (fan_out, fan_in), jnp.float32, -bound, bound)
        params[f"layer{i - 1}.bias"] = jax.random.uniform(
            kb, (fan_out,), jnp.float32, -bound, bound)
    return params


def _reference_forward(x_nchw, params, dtype=jnp.float32):
    """Plain-JAX reference mirroring the PyTorch forward (optionally with the
    same bf16 input rounding as the kernel)."""
    out = x_nchw.reshape(x_nchw.shape[0], -1).astype(dtype).astype(jnp.float32)
    w0 = params["layer0.weight"].astype(dtype).astype(jnp.float32)
    w1 = params["layer1.weight"].astype(dtype).astype(jnp.float32)
    w2 = params["layer2.weight"].astype(dtype).astype(jnp.float32)
    out = out @ w0.T + params["layer0.bias"]
    out = jnp.maximum(out, 0.0).astype(dtype).astype(jnp.float32)
    out = out @ w1.T + params["layer1.bias"]
    out = jnp.maximum(out, 0.0).astype(dtype).astype(jnp.float32)
    return out @ w2.T + params["layer2.bias"]


if __name__ == "__main__":
    # Small shapes consistent with the module's forward.
    batch, image_channels, image_size = 2, 4, 16
    classes, hidden_units = 10, 32

    key = jax.random.PRNGKey(0)
    key, kx = jax.random.split(key)
    x = jax.random.normal(kx, (batch, image_channels, image_size, image_size), jnp.float32)

    params = init_params(key, image_size, image_channels, classes, hidden_units)
    prepared = prepare_params(params)   # one-time weight prep, reused across calls

    logits = cmaml_forward(x, prepared, classes)
    logits = jax.block_until_ready(logits)
    assert logits.shape == (batch, classes), logits.shape

    # Tight check vs. a reference using the same bf16 input rounding (f32 accum).
    ref_bf16 = _reference_forward(x, params, dtype=jnp.bfloat16)
    assert jnp.allclose(logits, ref_bf16, atol=2e-3, rtol=2e-3), "mismatch vs bf16 reference"

    # Loose check vs. the full-f32 PyTorch-equivalent forward (bf16 input error).
    ref_f32 = _reference_forward(x, params, dtype=jnp.float32)
    assert jnp.allclose(logits, ref_f32, atol=5e-2, rtol=5e-2), "mismatch vs f32 reference"

    # TODO(synk): train_a_batch / _inner_update / reservoir memory / Adam are
    # host-side meta-learning logic, not part of forward; omitted.
    print("KERNEL_OK")
</pallas_src>

<mosaic_0001>
module attributes {stable_mosaic.version = 11 : i64} {
  func.func @_mlp_kernel(%arg0: i32, %arg1: memref<2x1024xbf16, #tpu.memory_space<vmem>>, %arg2: memref<1024x32xbf16, #tpu.memory_space<vmem>>, %arg3: memref<1x32xf32, #tpu.memory_space<vmem>>, %arg4: memref<32x32xbf16, #tpu.memory_space<vmem>>, %arg5: memref<1x32xf32, #tpu.memory_space<vmem>>, %arg6: memref<32x128xbf16, #tpu.memory_space<vmem>>, %arg7: memref<1x128xf32, #tpu.memory_space<vmem>>, %arg8: memref<2x128xf32, #tpu.memory_space<vmem>>) attributes {dimension_semantics = [#tpu.dimension_semantics<parallel>], iteration_bounds = array<i64: 1>, scalar_prefetch = 0 : i64, scratch_operands = 0 : i64, tpu.core_type = #tpu.core_type<tc>, window_params = [{transform_indices = @transform_0, window_bounds = array<i64: 2, 1024>}, {pipeline_mode = #tpu.pipeline_mode<synchronous>, transform_indices = @transform_1, window_bounds = array<i64: 1024, 32>}, {pipeline_mode = #tpu.pipeline_mode<synchronous>, transform_indices = @transform_2, window_bounds = array<i64: 1, 32>}, {pipeline_mode = #tpu.pipeline_mode<synchronous>, transform_indices = @transform_3, window_bounds = array<i64: 32, 32>}, {pipeline_mode = #tpu.pipeline_mode<synchronous>, transform_indices = @transform_4, window_bounds = array<i64: 1, 32>}, {pipeline_mode = #tpu.pipeline_mode<synchronous>, transform_indices = @transform_5, window_bounds = array<i64: 32, 128>}, {pipeline_mode = #tpu.pipeline_mode<synchronous>, transform_indices = @transform_6, window_bounds = array<i64: 1, 128>}, {transform_indices = @transform_7, window_bounds = array<i64: 2, 128>}]} {
    %c0 = arith.constant 0 : index
    %c0_0 = arith.constant 0 : index
    %0 = vector.load %arg1[%c0, %c0_0] : memref<2x1024xbf16, #tpu.memory_space<vmem>>, vector<2x1024xbf16>
    %c0_1 = arith.constant 0 : index
    %c0_2 = arith.constant 0 : index
    %1 = vector.load %arg2[%c0_1, %c0_2] : memref<1024x32xbf16, #tpu.memory_space<vmem>>, vector<1024x32xbf16>
    %cst = arith.constant dense<0.000000e+00> : vector<2x32xf32>
    %2 = tpu.matmul %0, %1, %cst {dimension_numbers = #tpu.dot_dimension_numbers<[1], [0], [0], [1], [0, 0, 1, 1], [], []>} : vector<2x1024xbf16>, vector<1024x32xbf16>, vector<2x32xf32> -> vector<2x32xf32>
    %c0_3 = arith.constant 0 : index
    %c0_4 = arith.constant 0 : index
    %3 = vector.load %arg3[%c0_3, %c0_4] : memref<1x32xf32, #tpu.memory_space<vmem>>, vector<1x32xf32>
    %4 = vector.broadcast %3 : vector<1x32xf32> to vector<2x32xf32>
    %5 = arith.addf %2, %4 : vector<2x32xf32>
    %cst_5 = arith.constant 0.000000e+00 : f32
    %6 = vector.broadcast %cst_5 : f32 to vector<2x32xf32>
    %7 = arith.maximumf %5, %6 : vector<2x32xf32>
    %8 = arith.truncf %7 : vector<2x32xf32> to vector<2x32xbf16>
    %c0_6 = arith.constant 0 : index
    %c0_7 = arith.constant 0 : index
    %9 = vector.load %arg4[%c0_6, %c0_7] : memref<32x32xbf16, #tpu.memory_space<vmem>>, vector<32x32xbf16>
    %cst_8 = arith.constant dense<0.000000e+00> : vector<2x32xf32>
    %10 = tpu.matmul %8, %9, %cst_8 {dimension_numbers = #tpu.dot_dimension_numbers<[1], [0], [0], [1], [0, 0, 1, 1], [], []>} : vector<2x32xbf16>, vector<32x32xbf16>, vector<2x32xf32> -> vector<2x32xf32>
    %c0_9 = arith.constant 0 : index
    %c0_10 = arith.constant 0 : index
    %11 = vector.load %arg5[%c0_9, %c0_10] : memref<1x32xf32, #tpu.memory_space<vmem>>, vector<1x32xf32>
    %12 = vector.broadcast %11 : vector<1x32xf32> to vector<2x32xf32>
    %13 = arith.addf %10, %12 : vector<2x32xf32>
    %cst_11 = arith.constant 0.000000e+00 : f32
    %14 = vector.broadcast %cst_11 : f32 to vector<2x32xf32>
    %15 = arith.maximumf %13, %14 : vector<2x32xf32>
    %16 = arith.truncf %15 : vector<2x32xf32> to vector<2x32xbf16>
    %c0_12 = arith.constant 0 : index
    %c0_13 = arith.constant 0 : index
    %17 = vector.load %arg6[%c0_12, %c0_13] : memref<32x128xbf16, #tpu.memory_space<vmem>>, vector<32x128xbf16>
    %cst_14 = arith.constant dense<0.000000e+00> : vector<2x128xf32>
    %18 = tpu.matmul %16, %17, %cst_14 {dimension_numbers = #tpu.dot_dimension_numbers<[1], [0], [0], [1], [0, 0, 1, 1], [], []>} : vector<2x32xbf16>, vector<32x128xbf16>, vector<2x128xf32> -> vector<2x128xf32>
    %c0_15 = arith.constant 0 : index
    %c0_16 = arith.constant 0 : index
    %19 = vector.load %arg7[%c0_15, %c0_16] : memref<1x128xf32, #tpu.memory_space<vmem>>, vector<1x128xf32>
    %20 = vector.broadcast %19 : vector<1x128xf32> to vector<2x128xf32>
    %21 = arith.addf %18, %20 : vector<2x128xf32>
    %c0_17 = arith.constant 0 : index
    %c0_18 = arith.constant 0 : index
    %22 = vector.load %arg8[%c0_17, %c0_18] : memref<2x128xf32, #tpu.memory_space<vmem>>, vector<2x128xf32>
    tpu.vector_store %arg8[%c0_17, %c0_18], %21 {strides = array<i32>} : memref<2x128xf32, #tpu.memory_space<vmem>>, vector<2x128xf32>,
    return
  }
  func.func @transform_0(%arg0: i32) -> (i32, i32) {
    %c0_i32 = arith.constant 0 : i32
    %c0_i32_0 = arith.constant 0 : i32
    return %arg0, %c0_i32 : i32, i32
  }
  func.func @transform_1(%arg0: i32) -> (i32, i32) {
    %c0_i32 = arith.constant 0 : i32
    %c0_i32_0 = arith.constant 0 : i32
    %c0_i32_1 = arith.constant 0 : i32
    return %c0_i32, %c0_i32_0 : i32, i32
  }
  func.func @transform_2(%arg0: i32) -> (i32, i32) {
    %c0_i32 = arith.constant 0 : i32
    %c0_i32_0 = arith.constant 0 : i32
    %c0_i32_1 = arith.constant 0 : i32
    return %c0_i32, %c0_i32_0 : i32, i32
  }
  func.func @transform_3(%arg0: i32) -> (i32, i32) {
    %c0_i32 = arith.constant 0 : i32
    %c0_i32_0 = arith.constant 0 : i32
    %c0_i32_1 = arith.constant 0 : i32
    return %c0_i32, %c0_i32_0 : i32, i32
  }
  func.func @transform_4(%arg0: i32) -> (i32, i32) {
    %c0_i32 = arith.constant 0 : i32
    %c0_i32_0 = arith.constant 0 : i32
    %c0_i32_1 = arith.constant 0 : i32
    return %c0_i32, %c0_i32_0 : i32, i32
  }
  func.func @transform_5(%arg0: i32) -> (i32, i32) {
    %c0_i32 = arith.constant 0 : i32
    %c0_i32_0 = arith.constant 0 : i32
    %c0_i32_1 = arith.constant 0 : i32
    return %c0_i32, %c0_i32_0 : i32, i32
  }
  func.func @transform_6(%arg0: i32) -> (i32, i32) {
    %c0_i32 = arith.constant 0 : i32
    %c0_i32_0 = arith.constant 0 : i32
    %c0_i32_1 = arith.constant 0 : i32
    return %c0_i32, %c0_i32_0 : i32, i32
  }
  func.func @transform_7(%arg0: i32) -> (i32, i32) {
    %c0_i32 = arith.constant 0 : i32
    %c0_i32_0 = arith.constant 0 : i32
    return %arg0, %c0_i32 : i32, i32
  }
}

</mosaic_0001>

<llo_original>
// kernel: cmaml_forward.1
$region0: #{cmaml_forward.1}
  #allocation0 [shape = 'u32[]', space=smem, size = 0x4, offset = 0x4, fixed_abs, tag = 'smem constant byte address 0x4 - core index']
  #allocation1 [shape = 'u32[72,128]{1,0:T(1,128)}', space=vmem, size = 0x9000, scoped, tag = 'internal scratch']
  %s0 = inlined_call_operand.vmem [shape: bf16[2,1024], index: 0, kind: input, shape index: {}]
  %s1 = inlined_call_operand.vmem [shape: bf16[1024,32], index: 1, kind: input, shape index: {}]
  %s2 = inlined_call_operand.vmem [shape: f32[1,32], index: 2, kind: input, shape index: {}]
  %s3 = inlined_call_operand.vmem [shape: bf16[32,32], index: 3, kind: input, shape index: {}]
  %s4 = inlined_call_operand.vmem [shape: f32[1,32], index: 4, kind: input, shape index: {}]
  %s5 = inlined_call_operand.vmem [shape: bf16[32,128], index: 5, kind: input, shape index: {}]
  %s6 = inlined_call_operand.vmem [shape: f32[1,128], index: 6, kind: input, shape index: {}]
  %s7 = inlined_call_operand.hbm [shape: f32[2,128], index: 7, kind: output, shape index: {}]
  %s8 = sld [smem:[#allocation0]]
  $region38: #{cmaml_forward.1} parent=0
    _
  %s10 = ssub.s32 1, %s8
  %s11 = scalar_select 0, %s10, %s8
  $region1: #{cmaml_forward.1} parent=0
    #allocation2 [shape = 'u8[1024]{0}', space=vmem, size = 0x400, scoped, tag = 'output window, operand 0, single buffered']
    #allocation3 [shape = 's32[1]{0}', space=sflag, size = 0x4, scoped, tag = 'scoped memory for cmaml_forward.1']
    %12 = vsyncpa [#allocation3], 0
    // Predicated region
    $region2: #{cmaml_forward.1} parent=1 // pred_check
      _
    $region3: #{cmaml_forward.1} parent=1 // pred_check_branch
      %14 = sbr.rel (0) target = $region5
    $region4: #{cmaml_forward.1} parent=1 // pred_region
      _
    $region5: #{cmaml_forward.1} parent=1 // pred_fallthru
      _
    // Predicated region
    $region6: #{cmaml_forward.1} parent=1 // pred_check
      _
    $region7: #{cmaml_forward.1} parent=1 // pred_check_branch
      %16 = sbr.rel (0) target = $region9
    $region8: #{cmaml_forward.1} parent=1 // pred_region
      _
    $region9: #{cmaml_forward.1} parent=1 // pred_fallthru
      _
    // Predicated region
    $region10: #{cmaml_forward.1} parent=1 // pred_check
      _
    $region11: #{cmaml_forward.1} parent=1 // pred_check_branch
      %18 = sbr.rel (0) target = $region13
    $region12: #{cmaml_forward.1} parent=1 // pred_region
      _
    $region13: #{cmaml_forward.1} parent=1 // pred_fallthru
      _
    // Predicated region
    $region14: #{cmaml_forward.1} parent=1 // pred_check
      _
    $region15: #{cmaml_forward.1} parent=1 // pred_check_branch
      %20 = sbr.rel (0) target = $region17
    $region16: #{cmaml_forward.1} parent=1 // pred_region
      _
    $region17: #{cmaml_forward.1} parent=1 // pred_fallthru
      _
    // Predicated region
    $region18: #{cmaml_forward.1} parent=1 // pred_check
      _
    $region19: #{cmaml_forward.1} parent=1 // pred_check_branch
      %22 = sbr.rel (0) target = $region21
    $region20: #{cmaml_forward.1} parent=1 // pred_region
      _
    $region21: #{cmaml_forward.1} parent=1 // pred_fallthru
      _
    // Predicated region
    $region22: #{cmaml_forward.1} parent=1 // pred_check
      _
    $region23: #{cmaml_forward.1} parent=1 // pred_check_branch
      %24 = sbr.rel (0) target = $region25
    $region24: #{cmaml_forward.1} parent=1 // pred_region
      _
    $region25: #{cmaml_forward.1} parent=1 // pred_fallthru
      _
    // Predicated region
    $region26: #{cmaml_forward.1} parent=1 // pred_check
      _
    $region27: #{cmaml_forward.1} parent=1 // pred_check_branch
      %26 = sbr.rel (0) target = $region29
    $region28: #{cmaml_forward.1} parent=1 // pred_region
      _
    $region29: #{cmaml_forward.1} parent=1 // pred_fallthru
      _
    %v28 = vld [vmem:[%s0] sm:$0xff]
    %v29 = vld [vmem:[%s1] sm:$0xf]
    %v30 = vld [vmem:[%s1 + $0x4] sm:$0xf]
    %v31 = vld [vmem:[%s1 + $0x8] sm:$0xf]
    %v32 = vld [vmem:[%s1 + $0xc] sm:$0xf]
    %v33 = vld [vmem:[%s1 + $0x10] sm:$0xf]
    %v34 = vld [vmem:[%s1 + $0x14] sm:$0xf]
    %v35 = vld [vmem:[%s1 + $0x18] sm:$0xf]
    %v36 = vld [vmem:[%s1 + $0x1c] sm:$0xf]
    %v37 = vld [vmem:[%s1 + $0x20] sm:$0xf]
    %v38 = vld [vmem:[%s1 + $0x24] sm:$0xf]
    %v39 = vld [vmem:[%s1 + $0x28] sm:$0xf]
    %v40 = vld [vmem:[%s1 + $0x2c] sm:$0xf]
    %v41 = vld [vmem:[%s1 + $0x30] sm:$0xf]
    %v42 = vld [vmem:[%s1 + $0x34] sm:$0xf]
    %v43 = vld [vmem:[%s1 + $0x38] sm:$0xf]
    %v44 = vld [vmem:[%s1 + $0x3c] sm:$0xf]
    %v45 = vld [vmem:[%s1 + $0x40] sm:$0xf]
    %v46 = vld [vmem:[%s1 + $0x44] sm:$0xf]
    %v47 = vld [vmem:[%s1 + $0x48] sm:$0xf]
    %v48 = vld [vmem:[%s1 + $0x4c] sm:$0xf]
    %v49 = vld [vmem:[%s1 + $0x50] sm:$0xf]
    %v50 = vld [vmem:[%s1 + $0x54] sm:$0xf]
    %v51 = vld [vmem:[%s1 + $0x58] sm:$0xf]
    %v52 = vld [vmem:[%s1 + $0x5c] sm:$0xf]
    %v53 = vld [vmem:[%s1 + $0x60] sm:$0xf]
    %v54 = vld [vmem:[%s1 + $0x64] sm:$0xf]
    %v55 = vld [vmem:[%s1 + $0x68] sm:$0xf]
    %v56 = vld [vmem:[%s1 + $0x6c] sm:$0xf]
    %v57 = vld [vmem:[%s1 + $0x70] sm:$0xf]
    %v58 = vld [vmem:[%s1 + $0x74] sm:$0xf]
    %v59 = vld [vmem:[%s1 + $0x78] sm:$0xf]
    %v60 = vld [vmem:[%s1 + $0x7c] sm:$0xf]
    %v61 = vld [vmem:[%s1 + $0x80] sm:$0xf]
    %v62 = vld [vmem:[%s1 + $0x84] sm:$0xf]
    %v63 = vld [vmem:[%s1 + $0x88] sm:$0xf]
    %v64 = vld [vmem:[%s1 + $0x8c] sm:$0xf]
    %v65 = vld [vmem:[%s1 + $0x90] sm:$0xf]
    %v66 = vld [vmem:[%s1 + $0x94] sm:$0xf]
    %v67 = vld [vmem:[%s1 + $0x98] sm:$0xf]
    %v68 = vld [vmem:[%s1 + $0x9c] sm:$0xf]
    %v69 = vld [vmem:[%s1 + $0xa0] sm:$0xf]
    %v70 = vld [vmem:[%s1 + $0xa4] sm:$0xf]
    %v71 = vld [vmem:[%s1 + $0xa8] sm:$0xf]
    %v72 = vld [vmem:[%s1 + $0xac] sm:$0xf]
    %v73 = vld [vmem:[%s1 + $0xb0] sm:$0xf]
    %v74 = vld [vmem:[%s1 + $0xb4] sm:$0xf]
    %v75 = vld [vmem:[%s1 + $0xb8] sm:$0xf]
    %v76 = vld [vmem:[%s1 + $0xbc] sm:$0xf]
    %v77 = vld [vmem:[%s1 + $0xc0] sm:$0xf]
    %v78 = vld [vmem:[%s1 + $0xc4] sm:$0xf]
    %v79 = vld [vmem:[%s1 + $0xc8] sm:$0xf]
    %v80 = vld [vmem:[%s1 + $0xcc] sm:$0xf]
    %v81 = vld [vmem:[%s1 + $0xd0] sm:$0xf]
    %v82 = vld [vmem:[%s1 + $0xd4] sm:$0xf]
    %v83 = vld [vmem:[%s1 + $0xd8] sm:$0xf]
    %v84 = vld [vmem:[%s1 + $0xdc] sm:$0xf]
    %v85 = vld [vmem:[%s1 + $0xe0] sm:$0xf]
    %v86 = vld [vmem:[%s1 + $0xe4] sm:$0xf]
    %v87 = vld [vmem:[%s1 + $0xe8] sm:$0xf]
    %v88 = vld [vmem:[%s1 + $0xec] sm:$0xf]
    %v89 = vld [vmem:[%s1 + $0xf0] sm:$0xf]
    %v90 = vld [vmem:[%s1 + $0xf4] sm:$0xf]
    %v91 = vld [vmem:[%s1 + $0xf8] sm:$0xf]
    %v92 = vld [vmem:[%s1 + $0xfc] sm:$0xf]
    %v93 = vld [vmem:[%s1 + $0x100] sm:$0xf]
    %v94 = vld [vmem:[%s1 + $0x104] sm:$0xf]
    %v95 = vld [vmem:[%s1 + $0x108] sm:$0xf]
    %v96 = vld [vmem:[%s1 + $0x10c] sm:$0xf]
    %v97 = vld [vmem:[%s1 + $0x110] sm:$0xf]
    %v98 = vld [vmem:[%s1 + $0x114] sm:$0xf]
    %v99 = vld [vmem:[%s1 + $0x118] sm:$0xf]
    %v100 = vld [vmem:[%s1 + $0x11c] sm:$0xf]
    %v101 = vld [vmem:[%s1 + $0x120] sm:$0xf]
    %v102 = vld [vmem:[%s1 + $0x124] sm:$0xf]
    %v103 = vld [vmem:[%s1 + $0x128] sm:$0xf]
    %v104 = vld [vmem:[%s1 + $0x12c] sm:$0xf]
    %v105 = vld [vmem:[%s1 + $0x130] sm:$0xf]
    %v106 = vld [vmem:[%s1 + $0x134] sm:$0xf]
    %v107 = vld [vmem:[%s1 + $0x138] sm:$0xf]
    %v108 = vld [vmem:[%s1 + $0x13c] sm:$0xf]
    %v109 = vld [vmem:[%s1 + $0x140] sm:$0xf]
    %v110 = vld [vmem:[%s1 + $0x144] sm:$0xf]
    %v111 = vld [vmem:[%s1 + $0x148] sm:$0xf]
    %v112 = vld [vmem:[%s1 + $0x14c] sm:$0xf]
    %v113 = vld [vmem:[%s1 + $0x150] sm:$0xf]
    %v114 = vld [vmem:[%s1 + $0x154] sm:$0xf]
    %v115 = vld [vmem:[%s1 + $0x158] sm:$0xf]
    %v116 = vld [vmem:[%s1 + $0x15c] sm:$0xf]
    %v117 = vld [vmem:[%s1 + $0x160] sm:$0xf]
    %v118 = vld [vmem:[%s1 + $0x164] sm:$0xf]
    %v119 = vld [vmem:[%s1 + $0x168] sm:$0xf]
    %v120 = vld [vmem:[%s1 + $0x16c] sm:$0xf]
    %v121 = vld [vmem:[%s1 + $0x170] sm:$0xf]
    %v122 = vld [vmem:[%s1 + $0x174] sm:$0xf]
    %v123 = vld [vmem:[%s1 + $0x178] sm:$0xf]
    %v124 = vld [vmem:[%s1 + $0x17c] sm:$0xf]
    %v125 = vld [vmem:[%s1 + $0x180] sm:$0xf]
    %v126 = vld [vmem:[%s1 + $0x184] sm:$0xf]
    %v127 = vld [vmem:[%s1 + $0x188] sm:$0xf]
    %v128 = vld [vmem:[%s1 + $0x18c] sm:$0xf]
    %v129 = vld [vmem:[%s1 + $0x190] sm:$0xf]
    %v130 = vld [vmem:[%s1 + $0x194] sm:$0xf]
    %v131 = vld [vmem:[%s1 + $0x198] sm:$0xf]
    %v132 = vld [vmem:[%s1 + $0x19c] sm:$0xf]
    %v133 = vld [vmem:[%s1 + $0x1a0] sm:$0xf]
    %v134 = vld [vmem:[%s1 + $0x1a4] sm:$0xf]
    %v135 = vld [vmem:[%s1 + $0x1a8] sm:$0xf]
    %v136 = vld [vmem:[%s1 + $0x1ac] sm:$0xf]
    %v137 = vld [vmem:[%s1 + $0x1b0] sm:$0xf]
    %v138 = vld [vmem:[%s1 + $0x1b4] sm:$0xf]
    %v139 = vld [vmem:[%s1 + $0x1b8] sm:$0xf]
    %v140 = vld [vmem:[%s1 + $0x1bc] sm:$0xf]
    %v141 = vld [vmem:[%s1 + $0x1c0] sm:$0xf]
    %v142 = vld [vmem:[%s1 + $0x1c4] sm:$0xf]
    %v143 = vld [vmem:[%s1 + $0x1c8] sm:$0xf]
    %v144 = vld [vmem:[%s1 + $0x1cc] sm:$0xf]
    %v145 = vld [vmem:[%s1 + $0x1d0] sm:$0xf]
    %v146 = vld [vmem:[%s1 + $0x1d4] sm:$0xf]
    %v147 = vld [vmem:[%s1 + $0x1d8] sm:$0xf]
    %v148 = vld [vmem:[%s1 + $0x1dc] sm:$0xf]
    %v149 = vld [vmem:[%s1 + $0x1e0] sm:$0xf]
    %v150 = vld [vmem:[%s1 + $0x1e4] sm:$0xf]
    %v151 = vld [vmem:[%s1 + $0x1e8] sm:$0xf]
    %v152 = vld [vmem:[%s1 + $0x1ec] sm:$0xf]
    %v153 = vld [vmem:[%s1 + $0x1f0] sm:$0xf]
    %v154 = vld [vmem:[%s1 + $0x1f4] sm:$0xf]
    %v155 = vld [vmem:[%s1 + $0x1f8] sm:$0xf]
    %v156 = vld [vmem:[%s1 + $0x1fc] sm:$0xf]
    %v157 = vld [vmem:[%s2] sm:$0x1]
    %v159 = vperm.slane %v157, 0
    %162 = vst [vmem:[#allocation1] ss:$9 sm:$0xff] %v28
    %v163 = vld [vmem:[#allocation1] sm:$0xff]
    %v164 = vld [vmem:[#allocation1 + $0x9] sm:$0xff]
    %v165 = vld [vmem:[#allocation1 + $0x12] sm:$0xff]
    %v166 = vld [vmem:[#allocation1 + $0x1b] sm:$0xff]
    %v167 = vld [vmem:[#allocation1 + $0x24] sm:$0xff]
    %v168 = vld [vmem:[#allocation1 + $0x2d] sm:$0xff]
    %v169 = vld [vmem:[#allocation1 + $0x36] sm:$0xff]
    %v170 = vld [vmem:[#allocation1 + $0x3f] sm:$0xff]
    %v307 = vunpack.c.l.b16 %v29
    %v308 = vunpack.c.l.b16 %v30
    %v309 = vunpack.c.l.b16 %v31
    %v310 = vunpack.c.l.b16 %v32
    %v311 = vunpack.c.l.b16 %v33
    %v312 = vunpack.c.l.b16 %v34
    %v313 = vunpack.c.l.b16 %v35
    %v314 = vunpack.c.l.b16 %v36
    %v315 = vunpack.c.l.b16 %v37
    %v316 = vunpack.c.l.b16 %v38
    %v317 = vunpack.c.l.b16 %v39
    %v318 = vunpack.c.l.b16 %v40
    %v319 = vunpack.c.l.b16 %v41
    %v320 = vunpack.c.l.b16 %v42
    %v321 = vunpack.c.l.b16 %v43
    %v322 = vunpack.c.l.b16 %v44
    %v323 = vunpack.c.l.b16 %v45
    %v324 = vunpack.c.l.b16 %v46
    %v325 = vunpack.c.l.b16 %v47
    %v326 = vunpack.c.l.b16 %v48
    %v327 = vunpack.c.l.b16 %v49
    %v328 = vunpack.c.l.b16 %v50
    %v329 = vunpack.c.l.b16 %v51
    %v330 = vunpack.c.l.b16 %v52
    %v331 = vunpack.c.l.b16 %v53
    %v332 = vunpack.c.l.b16 %v54
    %v333 = vunpack.c.l.b16 %v55
    %v334 = vunpack.c.l.b16 %v56
    %v335 = vunpack.c.l.b16 %v57
    %v336 = vunpack.c.l.b16 %v58
    %v337 = vunpack.c.l.b16 %v59
    %v338 = vunpack.c.l.b16 %v60
    %v339 = vunpack.c.l.b16 %v61
    %v340 = vunpack.c.l.b16 %v62
    %v341 = vunpack.c.l.b16 %v63
    %v342 = vunpack.c.l.b16 %v64
    %v343 = vunpack.c.l.b16 %v65
    %v344 = vunpack.c.l.b16 %v66
    %v345 = vunpack.c.l.b16 %v67
    %v346 = vunpack.c.l.b16 %v68
    %v347 = vunpack.c.l.b16 %v69
    %v348 = vunpack.c.l.b16 %v70
    %v349 = vunpack.c.l.b16 %v71
    %v350 = vunpack.c.l.b16 %v72
    %v351 = vunpack.c.l.b16 %v73
    %v352 = vunpack.c.l.b16 %v74
    %v353 = vunpack.c.l.b16 %v75
    %v354 = vunpack.c.l.b16 %v76
    %v355 = vunpack.c.l.b16 %v77
    %v356 = vunpack.c.l.b16 %v78
    %v357 = vunpack.c.l.b16 %v79
    %v358 = vunpack.c.l.b16 %v80
    %v359 = vunpack.c.l.b16 %v81
    %v360 = vunpack.c.l.b16 %v82
    %v361 = vunpack.c.l.b16 %v83
    %v362 = vunpack.c.l.b16 %v84
    %v363 = vunpack.c.l.b16 %v85
    %v364 = vunpack.c.l.b16 %v86
    %v365 = vunpack.c.l.b16 %v87
    %v366 = vunpack.c.l.b16 %v88
    %v367 = vunpack.c.l.b16 %v89
    %v368 = vunpack.c.l.b16 %v90
    %v369 = vunpack.c.l.b16 %v91
    %v370 = vunpack.c.l.b16 %v92
    %v371 = vunpack.c.l.b16 %v93
    %v372 = vunpack.c.l.b16 %v94
    %v373 = vunpack.c.l.b16 %v95
    %v374 = vunpack.c.l.b16 %v96
    %v375 = vunpack.c.l.b16 %v97
    %v376 = vunpack.c.l.b16 %v98
    %v377 = vunpack.c.l.b16 %v99
    %v378 = vunpack.c.l.b16 %v100
    %v379 = vunpack.c.l.b16 %v101
    %v380 = vunpack.c.l.b16 %v102
    %v381 = vunpack.c.l.b16 %v103
    %v382 = vunpack.c.l.b16 %v104
    %v383 = vunpack.c.l.b16 %v105
    %v384 = vunpack.c.l.b16 %v106
    %v385 = vunpack.c.l.b16 %v107
    %v386 = vunpack.c.l.b16 %v108
    %v387 = vunpack.c.l.b16 %v109
    %v388 = vunpack.c.l.b16 %v110
    %v389 = vunpack.c.l.b16 %v111
    %v390 = vunpack.c.l.b16 %v112
    %v391 = vunpack.c.l.b16 %v113
    %v392 = vunpack.c.l.b16 %v114
    %v393 = vunpack.c.l.b16 %v115
    %v394 = vunpack.c.l.b16 %v116
    %v395 = vunpack.c.l.b16 %v117
    %v396 = vunpack.c.l.b16 %v118
    %v397 = vunpack.c.l.b16 %v119
    %v398 = vunpack.c.l.b16 %v120
    %v399 = vunpack.c.l.b16 %v121
    %v400 = vunpack.c.l.b16 %v122
    %v401 = vunpack.c.l.b16 %v123
    %v402 = vunpack.c.l.b16 %v124
    %v403 = vunpack.c.l.b16 %v125
    %v404 = vunpack.c.l.b16 %v126
    %v405 = vunpack.c.l.b16 %v127
    %v406 = vunpack.c.l.b16 %v128
    %v407 = vunpack.c.l.b16 %v129
    %v408 = vunpack.c.l.b16 %v130
    %v409 = vunpack.c.l.b16 %v131
    %v410 = vunpack.c.l.b16 %v132
    %v411 = vunpack.c.l.b16 %v133
    %v412 = vunpack.c.l.b16 %v134
    %v413 = vunpack.c.l.b16 %v135
    %v414 = vunpack.c.l.b16 %v136
    %v415 = vunpack.c.l.b16 %v137
    %v416 = vunpack.c.l.b16 %v138
    %v417 = vunpack.c.l.b16 %v139
    %v418 = vunpack.c.l.b16 %v140
    %v419 = vunpack.c.l.b16 %v141
    %v420 = vunpack.c.l.b16 %v142
    %v421 = vunpack.c.l.b16 %v143
    %v422 = vunpack.c.l.b16 %v144
    %v423 = vunpack.c.l.b16 %v145
    %v424 = vunpack.c.l.b16 %v146
    %v425 = vunpack.c.l.b16 %v147
    %v426 = vunpack.c.l.b16 %v148
    %v427 = vunpack.c.l.b16 %v149
    %v428 = vunpack.c.l.b16 %v150
    %v429 = vunpack.c.l.b16 %v151
    %v430 = vunpack.c.l.b16 %v152
    %v431 = vunpack.c.l.b16 %v153
    %v432 = vunpack.c.l.b16 %v154
    %v433 = vunpack.c.l.b16 %v155
    %v434 = vunpack.c.l.b16 %v156
    %v435 = vpack.c.b16 %v308, %v307
    %v436 = vpack.c.b16 %v310, %v309
    %v437 = vpack.c.b16 %v312, %v311
    %v438 = vpack.c.b16 %v314, %v313
    %v439 = vpack.c.b16 %v316, %v315
    %v440 = vpack.c.b16 %v318, %v317
    %v441 = vpack.c.b16 %v320, %v319
    %v442 = vpack.c.b16 %v322, %v321
    %v443 = vpack.c.b16 %v324, %v323
    %v444 = vpack.c.b16 %v326, %v325
    %v445 = vpack.c.b16 %v328, %v327
    %v446 = vpack.c.b16 %v330, %v329
    %v447 = vpack.c.b16 %v332, %v331
    %v448 = vpack.c.b16 %v334, %v333
    %v449 = vpack.c.b16 %v336, %v335
    %v450 = vpack.c.b16 %v338, %v337
    %v451 = vpack.c.b16 %v340, %v339
    %v452 = vpack.c.b16 %v342, %v341
    %v453 = vpack.c.b16 %v344, %v343
    %v454 = vpack.c.b16 %v346, %v345
    %v455 = vpack.c.b16 %v348, %v347
    %v456 = vpack.c.b16 %v350, %v349
    %v457 = vpack.c.b16 %v352, %v351
    %v458 = vpack.c.b16 %v354, %v353
    %v459 = vpack.c.b16 %v356, %v355
    %v460 = vpack.c.b16 %v358, %v357
    %v461 = vpack.c.b16 %v360, %v359
    %v462 = vpack.c.b16 %v362, %v361
    %v463 = vpack.c.b16 %v364, %v363
    %v464 = vpack.c.b16 %v366, %v365
    %v465 = vpack.c.b16 %v368, %v367
    %v466 = vpack.c.b16 %v370, %v369
    %v467 = vpack.c.b16 %v372, %v371
    %v468 = vpack.c.b16 %v374, %v373
    %v469 = vpack.c.b16 %v376, %v375
    %v470 = vpack.c.b16 %v378, %v377
    %v471 = vpack.c.b16 %v380, %v379
    %v472 = vpack.c.b16 %v382, %v381
    %v473 = vpack.c.b16 %v384, %v383
    %v474 = vpack.c.b16 %v386, %v385
    %v475 = vpack.c.b16 %v388, %v387
    %v476 = vpack.c.b16 %v390, %v389
    %v477 = vpack.c.b16 %v392, %v391
    %v478 = vpack.c.b16 %v394, %v393
    %v479 = vpack.c.b16 %v396, %v395
    %v480 = vpack.c.b16 %v398, %v397
    %v481 = vpack.c.b16 %v400, %v399
    %v482 = vpack.c.b16 %v402, %v401
    %v483 = vpack.c.b16 %v404, %v403
    %v484 = vpack.c.b16 %v406, %v405
    %v485 = vpack.c.b16 %v408, %v407
    %v486 = vpack.c.b16 %v410, %v409
    %v487 = vpack.c.b16 %v412, %v411
    %v488 = vpack.c.b16 %v414, %v413
    %v489 = vpack.c.b16 %v416, %v415
    %v490 = vpack.c.b16 %v418, %v417
    %v491 = vpack.c.b16 %v420, %v419
    %v492 = vpack.c.b16 %v422, %v421
    %v493 = vpack.c.b16 %v424, %v423
    %v494 = vpack.c.b16 %v426, %v425
    %v495 = vpack.c.b16 %v428, %v427
    %v496 = vpack.c.b16 %v430, %v429
    %v497 = vpack.c.b16 %v432, %v431
    %v498 = vpack.c.b16 %v434, %v433
    %563 = vmatpush.bf16.msra.mxu0 %v442
    %564 = vmatpush.bf16.msra.mxu0 %v441
    %565 = vmatpush.bf16.msra.mxu0 %v440
    %566 = vmatpush.bf16.msra.mxu0 %v439
    %567 = vmatpush.bf16.msra.mxu0 %v438
    %568 = vmatpush.bf16.msra.mxu0 %v437
    %569 = vmatpush.bf16.msra.mxu0 %v436
    %570 = vmatpush.bf16.msra.mxu0 %v435
    %571 = vmatmul.bf16.gmra.mxu0 %v163
    %v572 = vpop.f32.mrf.mxu0
    %v573 = vadd.f32 %v159, %v572
    %v574 = vpop.f32.mrf.mxu0
    %575 = vdwg.mxu0
    %576 = vmatpush.bf16.msra.mxu0 %v450
    %577 = vmatpush.bf16.msra.mxu0 %v449
    %578 = vmatpush.bf16.msra.mxu0 %v448
    %579 = vmatpush.bf16.msra.mxu0 %v447
    %580 = vmatpush.bf16.msra.mxu0 %v446
    %581 = vmatpush.bf16.msra.mxu0 %v445
    %582 = vmatpush.bf16.msra.mxu0 %v444
    %583 = vmatpush.bf16.msra.mxu0 %v443
    %584 = vmatmul.bf16.gmra.mxu0 %v164
    %v585 = vpop.f32.mrf.mxu0
    %v586 = vadd.f32 %v573, %v585
    %v587 = vpop.f32.mrf.mxu0
    %588 = vdwg.mxu0
    %589 = vmatpush.bf16.msra.mxu0 %v458
    %590 = vmatpush.bf16.msra.mxu0 %v457
    %591 = vmatpush.bf16.msra.mxu0 %v456
    %592 = vmatpush.bf16.msra.mxu0 %v455
    %593 = vmatpush.bf16.msra.mxu0 %v454
    %594 = vmatpush.bf16.msra.mxu0 %v453
    %595 = vmatpush.bf16.msra.mxu0 %v452
    %596 = vmatpush.bf16.msra.mxu0 %v451
    %597 = vmatmul.bf16.gmra.mxu0 %v165
    %v598 = vpop.f32.mrf.mxu0
    %v599 = vadd.f32 %v586, %v598
    %v600 = vpop.f32.mrf.mxu0
    %601 = vdwg.mxu0
    %602 = vmatpush.bf16.msra.mxu0 %v466
    %603 = vmatpush.bf16.msra.mxu0 %v465
    %604 = vmatpush.bf16.msra.mxu0 %v464
    %605 = vmatpush.bf16.msra.mxu0 %v463
    %606 = vmatpush.bf16.msra.mxu0 %v462
    %607 = vmatpush.bf16.msra.mxu0 %v461
    %608 = vmatpush.bf16.msra.mxu0 %v460
    %609 = vmatpush.bf16.msra.mxu0 %v459
    %610 = vmatmul.bf16.gmra.mxu0 %v166
    %v611 = vpop.f32.mrf.mxu0
    %v612 = vadd.f32 %v599, %v611
    %v613 = vpop.f32.mrf.mxu0
    %614 = vdwg.mxu0
    %615 = vmatpush.bf16.msra.mxu0 %v474
    %616 = vmatpush.bf16.msra.mxu0 %v473
    %617 = vmatpush.bf16.msra.mxu0 %v472
    %618 = vmatpush.bf16.msra.mxu0 %v471
    %619 = vmatpush.bf16.msra.mxu0 %v470
    %620 = vmatpush.bf16.msra.mxu0 %v469
    %621 = vmatpush.bf16.msra.mxu0 %v468
    %622 = vmatpush.bf16.msra.mxu0 %v467
    %623 = vmatmul.bf16.gmra.mxu0 %v167
    %v624 = vpop.f32.mrf.mxu0
    %v625 = vadd.f32 %v612, %v624
    %v626 = vpop.f32.mrf.mxu0
    %627 = vdwg.mxu0
    %628 = vmatpush.bf16.msra.mxu0 %v482
    %629 = vmatpush.bf16.msra.mxu0 %v481
    %630 = vmatpush.bf16.msra.mxu0 %v480
    %631 = vmatpush.bf16.msra.mxu0 %v479
    %632 = vmatpush.bf16.msra.mxu0 %v478
    %633 = vmatpush.bf16.msra.mxu0 %v477
    %634 = vmatpush.bf16.msra.mxu0 %v476
    %635 = vmatpush.bf16.msra.mxu0 %v475
    %636 = vmatmul.bf16.gmra.mxu0 %v168
    %v637 = vpop.f32.mrf.mxu0
    %v638 = vadd.f32 %v625, %v637
    %v639 = vpop.f32.mrf.mxu0
    %640 = vdwg.mxu0
    %641 = vmatpush.bf16.msra.mxu0 %v490
    %642 = vmatpush.bf16.msra.mxu0 %v489
    %643 = vmatpush.bf16.msra.mxu0 %v488
    %644 = vmatpush.bf16.msra.mxu0 %v487
    %645 = vmatpush.bf16.msra.mxu0 %v486
    %646 = vmatpush.bf16.msra.mxu0 %v485
    %647 = vmatpush.bf16.msra.mxu0 %v484
    %648 = vmatpush.bf16.msra.mxu0 %v483
    %649 = vmatmul.bf16.gmra.mxu0 %v169
    %v650 = vpop.f32.mrf.mxu0
    %v651 = vadd.f32 %v638, %v650
    %v652 = vpop.f32.mrf.mxu0
    %653 = vdwg.mxu0
    %654 = vmatpush.bf16.msra.mxu0 %v498
    %655 = vmatpush.bf16.msra.mxu0 %v497
    %656 = vmatpush.bf16.msra.mxu0 %v496
    %657 = vmatpush.bf16.msra.mxu0 %v495
    %658 = vmatpush.bf16.msra.mxu0 %v494
    %659 = vmatpush.bf16.msra.mxu0 %v493
    %660 = vmatpush.bf16.msra.mxu0 %v492
    %661 = vmatpush.bf16.msra.mxu0 %v491
    %662 = vmatmul.bf16.gmra.mxu0 %v170
    %v663 = vpop.f32.mrf.mxu0
    %v664 = vadd.f32 %v651, %v663
    %v665 = vpop.f32.mrf.mxu0
    %666 = vdwg.mxu0
    %v667 = vmax.f32 %v664, 0.0
    %v668 = vpack.c.bf16 %v667, %v667
    %v669 = vld [vmem:[%s3] sm:$0xf]
    %v670 = vld [vmem:[%s3 + $0x4] sm:$0xf]
    %v671 = vld [vmem:[%s3 + $0x8] sm:$0xf]
    %v672 = vld [vmem:[%s3 + $0xc] sm:$0xf]
    %v673 = vld [vmem:[%s4] sm:$0x1]
    %v675 = vperm.slane %v673, 0
    %v681 = vunpack.c.l.b16 %v669
    %v682 = vunpack.c.l.b16 %v670
    %v683 = vunpack.c.l.b16 %v671
    %v684 = vunpack.c.l.b16 %v672
    %v685 = vpack.c.b16 %v682, %v681
    %v686 = vpack.c.b16 %v684, %v683
    %vm689 = vcmask 261120
    %v691 = vsel %vm689, %v668, 0
    %693 = vmatpush.bf16.msra.mxu0 0
    %694 = vmatpush.bf16.msra.mxu0 0
    %695 = vmatpush.bf16.msra.mxu0 0
    %696 = vmatpush.bf16.msra.mxu0 0
    %697 = vmatpush.bf16.msra.mxu0 0
    %698 = vmatpush.bf16.msra.mxu0 0
    %699 = vmatpush.bf16.msra.mxu0 %v686
    %700 = vmatpush.bf16.msra.mxu0 %v685
    %701 = vmatmul.bf16.gmra.mxu0 %v691
    %v702 = vpop.f32.mrf.mxu0
    %v703 = vadd.f32 %v675, %v702
    %v704 = vpop.f32.mrf.mxu0
    %705 = vdwg.mxu0
    %v706 = vmax.f32 %v703, 0.0
    %v707 = vpack.c.bf16 %v706, %v706
    %v708 = vld [vmem:[%s5] sm:$0xf]
    %v709 = vld [vmem:[%s5 + $0x4] sm:$0xf]
    %v710 = vld [vmem:[%s5 + $0x8] sm:$0xf]
    %v711 = vld [vmem:[%s5 + $0xc] sm:$0xf]
    %v712 = vld [vmem:[%s6] sm:$0x1]
    %v714 = vperm.slane %v712, 0
    %v720 = vunpack.c.l.b16 %v708
    %v721 = vunpack.c.l.b16 %v709
    %v722 = vunpack.c.l.b16 %v710
    %v723 = vunpack.c.l.b16 %v711
    %v724 = vpack.c.b16 %v721, %v720
    %v725 = vpack.c.b16 %v723, %v722
    %v729 = vsel %vm689, %v707, 0
    %731 = vmatpush.bf16.msra.mxu0 0
    %732 = vmatpush.bf16.msra.mxu0 0
    %733 = vmatpush.bf16.msra.mxu0 0
    %734 = vmatpush.bf16.msra.mxu0 0
    %735 = vmatpush.bf16.msra.mxu0 0
    %736 = vmatpush.bf16.msra.mxu0 0
    %737 = vmatpush.bf16.msra.mxu0 %v725
    %738 = vmatpush.bf16.msra.mxu0 %v724
    %739 = vmatmul.bf16.gmra.mxu0 %v729
    %v740 = vpop.f32.mrf.mxu0
    %v741 = vadd.f32 %v714, %v740
    %v742 = vpop.f32.mrf.mxu0
    %743 = vdwg.mxu0
    %744 = vst [vmem:[#allocation2] sm:$0x3] %v741
    // Predicated region
    $region30: #{cmaml_forward.1} parent=1 // pred_check
      _
    $region31: #{cmaml_forward.1} parent=1 // pred_check_branch
      %746 = sbr.rel (0) target = $region33
    $region32: #{cmaml_forward.1} parent=1 // pred_region
      %748 = vsyncadd [#allocation3], 0
      %s750 = sshll.u32 [#allocation2], 4
      %s751 = int_to_ptr.vmem [resolvable:$true] %s750
      %s752 = sshll.u32 %s7, 4
      %s753 = int_to_ptr.hbm [resolvable:$true] %s752
      %755 = dma.vmem_to_hbm [thread:$0]  %s751, 32, %s753, [#allocation3]
    $region33: #{cmaml_forward.1} parent=1 // pred_fallthru
      _
    // Predicated region
    $region34: #{cmaml_forward.1} parent=1 // pred_check
      _
    $region35: #{cmaml_forward.1} parent=1 // pred_check_branch
      %757 = sbr.rel (0) target = $region37
    $region36: #{cmaml_forward.1} parent=1 // pred_region
      %759 = dma.done [#allocation3], 32
    $region37: #{cmaml_forward.1} parent=1 // pred_fallthru
      _
    %760 = vsyncpa [#allocation3], 1

</llo_original>
